<compile_context>
chip_gen: v6e
topology: v6e:2x2x1
jax: 0.10.0
libtpu: 0.0.40
codegen_flags: <defaults>
</compile_context>

<pallas_src>
import functools

import jax
import jax.numpy as jnp
import numpy as np
from jax.experimental import pallas as pl
from jax.experimental.pallas import tpu as pltpu

LANE = 128


def _round_up(x, m):
    return ((x + m - 1) // m) * m


# ----------------------------------------------------------------------------
# Group derivation — mirrors the PyTorch constructor exactly.
# ----------------------------------------------------------------------------
def derive_groups(binary_mat):
    """Returns a list of (selected_state_idx, group_size).

    Group g writes dx[:, g : g + group_size] (the PyTorch forward uses the
    group-list index as the starting column)."""
    n_x_o, n_x_b = binary_mat.shape
    full_cond = [int(np.prod(binary_mat[i])) for i in range(n_x_o)]
    groups = []
    i = 0
    while i < n_x_o:
        if full_cond[i] == 0:
            sel = [j for j in range(n_x_b) if binary_mat[i, j] == 1]
            groups.append((sel, 1))
        else:
            cnt = 1
            while i + cnt < n_x_o and full_cond[i + cnt] == 1:
                cnt += 1
            groups.append((list(range(n_x_b)), cnt))
            i = i + cnt - 1
        i += 1
    return groups


# ----------------------------------------------------------------------------
# Synthetic sub-network parameters (the module's nn.Linear weights; here we
# use non-degenerate random values instead of the std=1e-8 init so that the
# correctness check is meaningful — the forward structure is identical).
# ----------------------------------------------------------------------------
def init_subnets(key, groups, n_u, n_feat, num_hidden_layers):
    subnets = []
    for (sel, size) in groups:
        n_in = len(sel) + n_u
        key, *ks = jax.random.split(key, 5)
        sub = {
            "W_in": 0.4 * jax.random.normal(ks[0], (n_in, n_feat), jnp.float32),
            "b_in": 0.1 * jax.random.normal(ks[1], (n_feat,), jnp.float32),
            "W_hid": [], "b_hid": [],
            "W_out": 0.4 * jax.random.normal(ks[2], (n_feat, size), jnp.float32),
            "b_out": 0.1 * jax.random.normal(ks[3], (size,), jnp.float32),
        }
        for _ in range(num_hidden_layers - 1):
            key, k1, k2 = jax.random.split(key, 3)
            sub["W_hid"].append(
                (0.3 / np.sqrt(n_feat))
                * jax.random.normal(k1, (n_feat, n_feat), jnp.float32))
            sub["b_hid"].append(
                0.1 * jax.random.normal(k2, (n_feat,), jnp.float32))
        subnets.append(sub)
    return subnets


# ----------------------------------------------------------------------------
# Pack the per-group sub-networks into per-layer matrices (done ONCE,
# wrapper-side — nothing is recomputed per call / per grid step).
# Weights → bf16, biases → f32.
# ----------------------------------------------------------------------------
def pack_params(subnets, groups, n_x_b, n_u, n_feat, n_x_o, num_hidden_layers,
                *, slab=LANE):
    G = len(groups)
    H = G * n_feat
    # Slab tiling of the block-diagonal hidden layers requires every
    # n_feat x n_feat group block to sit inside one slab; otherwise fall back
    # to a single dense slab.  (Use slab=256 on v6e/v7x once H >= 256.)
    if n_feat > slab or slab % n_feat != 0:
        slab = _round_up(H, LANE)
    H_pad = _round_up(H, slab)
    num_slabs = H_pad // slab
    N_pad = _round_up(n_x_o, LANE)

    # ---- Input layer: per-group gather of x_b columns == row scatter of W.
    # x_b and u keep their true (un-padded) contraction lengths.
    W1x = np.zeros((n_x_b, H_pad), np.float32)
    W1u = np.zeros((n_u, H_pad), np.float32)
    b1 = np.zeros((1, H_pad), np.float32)
    for g, (sel, _) in enumerate(groups):
        Wg = np.asarray(subnets[g]["W_in"])           # (len(sel)+n_u, n_feat)
        c0 = g * n_feat
        for k, srow in enumerate(sel):
            W1x[srow, c0:c0 + n_feat] = Wg[k]
        W1u[:, c0:c0 + n_feat] = Wg[len(sel):]
        b1[0, c0:c0 + n_feat] = np.asarray(subnets[g]["b_in"])

    # ---- Hidden layers: block-diagonal, stored per column slab so the
    # kernel multiplies only the matching aligned row slab.
    hidden = []
    for l in range(num_hidden_layers - 1):
        Ws = np.zeros((num_slabs, slab, slab), np.float32)
        bl = np.zeros((1, H_pad), np.float32)
        for g in range(G):
            c0 = g * n_feat
            s, loc = divmod(c0, slab)
            Ws[s, loc:loc + n_feat, loc:loc + n_feat] = np.asarray(
                subnets[g]["W_hid"][l])
            bl[0, c0:c0 + n_feat] = np.asarray(subnets[g]["b_hid"][l])
        hidden.append((jnp.asarray(Ws, jnp.bfloat16),
                       jnp.asarray(bl, jnp.float32)))

    # ---- Output layer: block-placed + "last writer wins" mask (matches the
    # sequential PyTorch writes dx[:, g:g+size]).
    # TODO(synk): output columns never written by any group stay zero here,
    # whereas torch.empty leaves them uninitialized (undefined) — intentional.
    writer = np.full((n_x_o,), -1, np.int64)
    for g, (_, size) in enumerate(groups):
        writer[g:min(g + size, n_x_o)] = g
    Wo = np.zeros((H_pad, N_pad), np.float32)
    bo = np.zeros((1, N_pad), np.float32)
    for g, (_, size) in enumerate(groups):
        Wg = np.asarray(subnets[g]["W_out"])          # (n_feat, size)
        bg = np.asarray(subnets[g]["b_out"])
        for j in range(size):
            c = g + j
            if c < n_x_o and writer[c] == g:
                Wo[g * n_feat:(g + 1) * n_feat, c] = Wg[:, j]
                bo[0, c] = bg[j]

    return dict(
        w1x=jnp.asarray(W1x, jnp.bfloat16),
        w1u=jnp.asarray(W1u, jnp.bfloat16),
        b1=jnp.asarray(b1, jnp.float32),
        hidden=hidden,
        wo=jnp.asarray(Wo, jnp.bfloat16),
        bo=jnp.asarray(bo, jnp.float32),
        num_slabs=num_slabs, slab=slab, H_pad=H_pad, N_pad=N_pad,
        n_x_o=n_x_o, num_hidden=num_hidden_layers - 1,
    )


# ----------------------------------------------------------------------------
# Pallas kernel: the whole fused MLP for one batch tile.
# bf16 MXU matmuls with f32 accumulation; bias add + tanh in f32.
# ----------------------------------------------------------------------------
def _fans_kernel(num_hidden, num_slabs, slab,
                 xb_ref, u_ref, w1x_ref, w1u_ref, b1_ref, *rest):
    *hidden_refs, w_out_ref, b_out_ref, out_ref = rest

    # Layer 1: two true-K dots (no 128-wide zero padding of the contraction).
    xb = xb_ref[...].astype(jnp.bfloat16)
    uu = u_ref[...].astype(jnp.bfloat16)
    pre = (jnp.dot(xb, w1x_ref[...], preferred_element_type=jnp.float32)
           + jnp.dot(uu, w1u_ref[...], preferred_element_type=jnp.float32)
           + b1_ref[...])
    h = jnp.tanh(pre)

    # Hidden layers: block-diagonal → one (tile, slab) x (slab, slab) matmul
    # per aligned column slab instead of a dense HxH matmul.
    for l in range(num_hidden):
        w = hidden_refs[2 * l]          # (num_slabs, slab, slab) bf16
        b = hidden_refs[2 * l + 1]      # (1, H_pad) f32
        h_bf = h.astype(jnp.bfloat16)
        cols = [jnp.dot(h_bf[:, s * slab:(s + 1) * slab], w[s],
                        preferred_element_type=jnp.float32)
                for s in range(num_slabs)]
        pre = (cols[0] if num_slabs == 1
               else jnp.concatenate(cols, axis=-1)) + b[...]
        h = jnp.tanh(pre)

    # Output layer: lane-dense (N_pad multiple of 128) → unmasked stores.
    out_ref[...] = (
        jnp.dot(h.astype(jnp.bfloat16), w_out_ref[...],
                preferred_element_type=jnp.float32)
        + b_out_ref[...]).astype(out_ref.dtype)


# ----------------------------------------------------------------------------
# Wrapper — batch tiling, VMEM budget, cost estimate, pallas_call.
# ----------------------------------------------------------------------------
def fans_forward(x_b, u, packed, *, batch_tile=256):
    """batch_tile: per-step M.  256 matches v6e/v7x MXU width (use 128 on
    v5e).  When B <= batch_tile the whole batch runs in a single grid step.
    For large B on v7x choose batch_tile so B_pad/batch_tile is even (both
    TensorCores busy via the "parallel" batch axis)."""
    B, n_x_b = x_b.shape
    n_u = u.shape[1]
    H_pad, N_pad = packed["H_pad"], packed["N_pad"]
    num_hidden = packed["num_hidden"]
    num_slabs, slab = packed["num_slabs"], packed["slab"]

    if B <= batch_tile:
        tile = max(8, _round_up(B, 8))        # single grid step, no pipeline overhead
    else:
        tile = batch_tile
    B_pad = _round_up(B, tile)

    xb_p = jnp.pad(x_b.astype(jnp.float32), ((0, B_pad - B), (0, 0)))
    u_p = jnp.pad(u.astype(jnp.float32), ((0, B_pad - B), (0, 0)))

    hidden_flat = []
    for (Ws, bl) in packed["hidden"]:
        hidden_flat += [Ws, bl]
    const_inputs = (packed["w1x"], packed["w1u"], packed["b1"],
                    *hidden_flat, packed["wo"], packed["bo"])
    inputs = (xb_p, u_p) + const_inputs

    # Explicit VMEM budget: weights/biases (single-buffered) + activations.
    weight_bytes = sum(int(np.prod(a.shape)) * a.dtype.itemsize
                       for a in const_inputs)
    act_bytes = tile * (n_x_b + n_u + 3 * H_pad + N_pad) * 4
    vmem_limit = int(min(max(4 * (weight_bytes + act_bytes) + (4 << 20),
                             16 << 20), 64 << 20))

    K1 = n_x_b + n_u
    cost = pl.CostEstimate(
        flops=int(2 * B_pad * (K1 * H_pad + num_hidden * H_pad * slab
                               + H_pad * N_pad)),
        transcendentals=int(B_pad * H_pad * (1 + num_hidden)),
        bytes_accessed=int(weight_bytes + B_pad * (K1 + N_pad) * 4),
    )

    kernel = functools.partial(_fans_kernel, num_hidden, num_slabs, slab)
    out_shape = jax.ShapeDtypeStruct((B_pad, N_pad), jnp.float32)

    def run(single_buffer_weights):
        def const_spec(a):
            if single_buffer_weights:
                # Block index never changes → one VMEM buffer is enough.
                return pl.BlockSpec(a.shape, lambda i: (0,) * a.ndim,
                                    pipeline_mode=pl.Buffered(1))
            return pl.BlockSpec(a.shape, lambda i: (0,) * a.ndim)

        in_specs = [pl.BlockSpec((tile, n_x_b), lambda i: (i, 0)),
                    pl.BlockSpec((tile, n_u), lambda i: (i, 0))]
        in_specs += [const_spec(a) for a in const_inputs]

        return pl.pallas_call(
            kernel,
            out_shape=out_shape,
            grid=(B_pad // tile,),
            in_specs=in_specs,
            out_specs=pl.BlockSpec((tile, N_pad), lambda i: (i, 0)),
            compiler_params=pltpu.CompilerParams(
                dimension_semantics=("parallel",),
                vmem_limit_bytes=vmem_limit),
            cost_estimate=cost,
        )(*inputs)

    try:
        out = jax.block_until_ready(run(True))
    except Exception:
        # pipeline_mode=pl.Buffered(1) not accepted on this build — fall back
        # to default double-buffered weight specs (correctness unchanged).
        out = jax.block_until_ready(run(False))

    return out[:B, :packed["n_x_o"]]


# ----------------------------------------------------------------------------
# Pure-numpy reference mirroring the PyTorch forward (for verification).
# ----------------------------------------------------------------------------
def reference_forward(x_b, u, subnets, groups, n_x_o):
    x_b = np.asarray(x_b, np.float32)
    u = np.asarray(u, np.float32)
    B = x_b.shape[0]
    dx = np.zeros((B, n_x_o), np.float32)   # torch.empty → defined as zeros
    for g, (sel, size) in enumerate(groups):
        sub = subnets[g]
        z = np.concatenate([x_b[:, sel], u], axis=-1)
        h = np.tanh(z @ np.asarray(sub["W_in"]) + np.asarray(sub["b_in"]))
        for Wl, bl in zip(sub["W_hid"], sub["b_hid"]):
            h = np.tanh(h @ np.asarray(Wl) + np.asarray(bl))
        out = h @ np.asarray(sub["W_out"]) + np.asarray(sub["b_out"])
        hi = min(g + size, n_x_o)
        dx[:, g:hi] = out[:, :hi - g]
    return dx


# ----------------------------------------------------------------------------
if __name__ == "__main__":
    B = 16
    n_x_b, n_x_o, n_u = 4, 4, 3
    n_feat = 32
    num_hidden_layers = 2

    # One all-ones row (full-input group) + three sparse rows.
    binary_mat = np.array([
        [1, 1, 1, 1],
        [1, 0, 1, 1],
        [0, 1, 1, 0],
        [1, 1, 0, 1],
    ], dtype=np.int64)

    groups = derive_groups(binary_mat)          # 4 groups → H = 4*32 = 128

    key = jax.random.PRNGKey(0)
    key, kx, ku, kw = jax.random.split(key, 4)
    x_b = jax.random.normal(kx, (B, n_x_b), jnp.float32)
    u = jax.random.normal(ku, (B, n_u), jnp.float32)

    subnets = init_subnets(kw, groups, n_u, n_feat, num_hidden_layers)
    packed = pack_params(subnets, groups, n_x_b, n_u, n_feat, n_x_o,
                         num_hidden_layers, slab=LANE)

    dx = fans_forward(x_b, u, packed, batch_tile=256)
    dx = jax.block_until_ready(dx)

    ref = reference_forward(x_b, u, subnets, groups, n_x_o)
    # bf16 matmul operands → ~1e-2 relative error budget for this MLP depth.
    np.testing.assert_allclose(np.asarray(dx), ref, rtol=5e-2, atol=5e-2)

    print("KERNEL_OK")
</pallas_src>

<mosaic_0001>
module attributes {stable_mosaic.version = 11 : i64} {
  func.func @_fans_kernel(%arg0: i32, %arg1: memref<16x4xf32, #tpu.memory_space<vmem>>, %arg2: memref<16x3xf32, #tpu.memory_space<vmem>>, %arg3: memref<4x128xbf16, #tpu.memory_space<vmem>>, %arg4: memref<3x128xbf16, #tpu.memory_space<vmem>>, %arg5: memref<1x128xf32, #tpu.memory_space<vmem>>, %arg6: memref<1x128x128xbf16, #tpu.memory_space<vmem>>, %arg7: memref<1x128xf32, #tpu.memory_space<vmem>>, %arg8: memref<128x128xbf16, #tpu.memory_space<vmem>>, %arg9: memref<1x128xf32, #tpu.memory_space<vmem>>, %arg10: memref<16x128xf32, #tpu.memory_space<vmem>>) attributes {dimension_semantics = [#tpu.dimension_semantics<parallel>], iteration_bounds = array<i64: 1>, scalar_prefetch = 0 : i64, scratch_operands = 0 : i64, tpu.core_type = #tpu.core_type<tc>, window_params = [{transform_indices = @transform_0, window_bounds = array<i64: 16, 4>}, {transform_indices = @transform_1, window_bounds = array<i64: 16, 3>}, {pipeline_mode = #tpu.pipeline_mode<synchronous>, transform_indices = @transform_2, window_bounds = array<i64: 4, 128>}, {pipeline_mode = #tpu.pipeline_mode<synchronous>, transform_indices = @transform_3, window_bounds = array<i64: 3, 128>}, {pipeline_mode = #tpu.pipeline_mode<synchronous>, transform_indices = @transform_4, window_bounds = array<i64: 1, 128>}, {pipeline_mode = #tpu.pipeline_mode<synchronous>, transform_indices = @transform_5, window_bounds = array<i64: 1, 128, 128>}, {pipeline_mode = #tpu.pipeline_mode<synchronous>, transform_indices = @transform_6, window_bounds = array<i64: 1, 128>}, {pipeline_mode = #tpu.pipeline_mode<synchronous>, transform_indices = @transform_7, window_bounds = array<i64: 128, 128>}, {pipeline_mode = #tpu.pipeline_mode<synchronous>, transform_indices = @transform_8, window_bounds = array<i64: 1, 128>}, {transform_indices = @transform_9, window_bounds = array<i64: 16, 128>}]} {
    %c0 = arith.constant 0 : index
    %c0_0 = arith.constant 0 : index
    %0 = vector.load %arg1[%c0, %c0_0] : memref<16x4xf32, #tpu.memory_space<vmem>>, vector<16x4xf32>
    %1 = arith.truncf %0 : vector<16x4xf32> to vector<16x4xbf16>
    %c0_1 = arith.constant 0 : index
    %c0_2 = arith.constant 0 : index
    %2 = vector.load %arg2[%c0_1, %c0_2] : memref<16x3xf32, #tpu.memory_space<vmem>>, vector<16x3xf32>
    %3 = arith.truncf %2 : vector<16x3xf32> to vector<16x3xbf16>
    %c0_3 = arith.constant 0 : index
    %c0_4 = arith.constant 0 : index
    %4 = vector.load %arg3[%c0_3, %c0_4] : memref<4x128xbf16, #tpu.memory_space<vmem>>, vector<4x128xbf16>
    %cst = arith.constant dense<0.000000e+00> : vector<16x128xf32>
    %5 = tpu.matmul %1, %4, %cst {dimension_numbers = #tpu.dot_dimension_numbers<[1], [0], [0], [1], [0, 0, 1, 1], [], []>} : vector<16x4xbf16>, vector<4x128xbf16>, vector<16x128xf32> -> vector<16x128xf32>
    %c0_5 = arith.constant 0 : index
    %c0_6 = arith.constant 0 : index
    %6 = vector.load %arg4[%c0_5, %c0_6] : memref<3x128xbf16, #tpu.memory_space<vmem>>, vector<3x128xbf16>
    %cst_7 = arith.constant dense<0.000000e+00> : vector<16x128xf32>
    %7 = tpu.matmul %3, %6, %cst_7 {dimension_numbers = #tpu.dot_dimension_numbers<[1], [0], [0], [1], [0, 0, 1, 1], [], []>} : vector<16x3xbf16>, vector<3x128xbf16>, vector<16x128xf32> -> vector<16x128xf32>
    %8 = arith.addf %5, %7 : vector<16x128xf32>
    %c0_8 = arith.constant 0 : index
    %c0_9 = arith.constant 0 : index
    %9 = vector.load %arg5[%c0_8, %c0_9] : memref<1x128xf32, #tpu.memory_space<vmem>>, vector<1x128xf32>
    %10 = vector.broadcast %9 : vector<1x128xf32> to vector<16x128xf32>
    %11 = arith.addf %8, %10 : vector<16x128xf32>
    %12 = math.tanh %11 : vector<16x128xf32>
    %13 = arith.truncf %12 : vector<16x128xf32> to vector<16x128xbf16>
    %c0_10 = arith.constant 0 : index
    %c0_11 = arith.constant 0 : index
    %c0_12 = arith.constant 0 : index
    %14 = vector.load %arg6[%c0_10, %c0_11, %c0_12] : memref<1x128x128xbf16, #tpu.memory_space<vmem>>, vector<1x128x128xbf16>
    %15 = vector.shape_cast %14 : vector<1x128x128xbf16> to vector<128x128xbf16>
    %cst_13 = arith.constant dense<0.000000e+00> : vector<16x128xf32>
    %16 = tpu.matmul %13, %15, %cst_13 {dimension_numbers = #tpu.dot_dimension_numbers<[1], [0], [0], [1], [0, 0, 1, 1], [], []>} : vector<16x128xbf16>, vector<128x128xbf16>, vector<16x128xf32> -> vector<16x128xf32>
    %c0_14 = arith.constant 0 : index
    %c0_15 = arith.constant 0 : index
    %17 = vector.load %arg7[%c0_14, %c0_15] : memref<1x128xf32, #tpu.memory_space<vmem>>, vector<1x128xf32>
    %18 = vector.broadcast %17 : vector<1x128xf32> to vector<16x128xf32>
    %19 = arith.addf %16, %18 : vector<16x128xf32>
    %20 = math.tanh %19 : vector<16x128xf32>
    %21 = arith.truncf %20 : vector<16x128xf32> to vector<16x128xbf16>
    %c0_16 = arith.constant 0 : index
    %c0_17 = arith.constant 0 : index
    %22 = vector.load %arg8[%c0_16, %c0_17] : memref<128x128xbf16, #tpu.memory_space<vmem>>, vector<128x128xbf16>
    %cst_18 = arith.constant dense<0.000000e+00> : vector<16x128xf32>
    %23 = tpu.matmul %21, %22, %cst_18 {dimension_numbers = #tpu.dot_dimension_numbers<[1], [0], [0], [1], [0, 0, 1, 1], [], []>} : vector<16x128xbf16>, vector<128x128xbf16>, vector<16x128xf32> -> vector<16x128xf32>
    %c0_19 = arith.constant 0 : index
    %c0_20 = arith.constant 0 : index
    %24 = vector.load %arg9[%c0_19, %c0_20] : memref<1x128xf32, #tpu.memory_space<vmem>>, vector<1x128xf32>
    %25 = vector.broadcast %24 : vector<1x128xf32> to vector<16x128xf32>
    %26 = arith.addf %23, %25 : vector<16x128xf32>
    %c0_21 = arith.constant 0 : index
    %c0_22 = arith.constant 0 : index
    %27 = vector.load %arg10[%c0_21, %c0_22] : memref<16x128xf32, #tpu.memory_space<vmem>>, vector<16x128xf32>
    tpu.vector_store %arg10[%c0_21, %c0_22], %26 {strides = array<i32>} : memref<16x128xf32, #tpu.memory_space<vmem>>, vector<16x128xf32>,
    return
  }
  func.func @transform_0(%arg0: i32) -> (i32, i32) {
    %c0_i32 = arith.constant 0 : i32
    %c0_i32_0 = arith.constant 0 : i32
    return %arg0, %c0_i32 : i32, i32
  }
  func.func @transform_1(%arg0: i32) -> (i32, i32) {
    %c0_i32 = arith.constant 0 : i32
    %c0_i32_0 = arith.constant 0 : i32
    return %arg0, %c0_i32 : i32, i32
  }
  func.func @transform_2(%arg0: i32) -> (i32, i32) {
    %c0_i32 = arith.constant 0 : i32
    %c0_i32_0 = arith.constant 0 : i32
    %c0_i32_1 = arith.constant 0 : i32
    return %c0_i32, %c0_i32_0 : i32, i32
  }
  func.func @transform_3(%arg0: i32) -> (i32, i32) {
    %c0_i32 = arith.constant 0 : i32
    %c0_i32_0 = arith.constant 0 : i32
    %c0_i32_1 = arith.constant 0 : i32
    return %c0_i32, %c0_i32_0 : i32, i32
  }
  func.func @transform_4(%arg0: i32) -> (i32, i32) {
    %c0_i32 = arith.constant 0 : i32
    %c0_i32_0 = arith.constant 0 : i32
    %c0_i32_1 = arith.constant 0 : i32
    return %c0_i32, %c0_i32_0 : i32, i32
  }
  func.func @transform_5(%arg0: i32) -> (i32, i32, i32) {
    %c0_i32 = arith.constant 0 : i32
    %c0_i32_0 = arith.constant 0 : i32
    %c0_i32_1 = arith.constant 0 : i32
    %c0_i32_2 = arith.constant 0 : i32
    return %c0_i32, %c0_i32_0, %c0_i32_1 : i32, i32, i32
  }
  func.func @transform_6(%arg0: i32) -> (i32, i32) {
    %c0_i32 = arith.constant 0 : i32
    %c0_i32_0 = arith.constant 0 : i32
    %c0_i32_1 = arith.constant 0 : i32
    return %c0_i32, %c0_i32_0 : i32, i32
  }
  func.func @transform_7(%arg0: i32) -> (i32, i32) {
    %c0_i32 = arith.constant 0 : i32
    %c0_i32_0 = arith.constant 0 : i32
    %c0_i32_1 = arith.constant 0 : i32
    return %c0_i32, %c0_i32_0 : i32, i32
  }
  func.func @transform_8(%arg0: i32) -> (i32, i32) {
    %c0_i32 = arith.constant 0 : i32
    %c0_i32_0 = arith.constant 0 : i32
    %c0_i32_1 = arith.constant 0 : i32
    return %c0_i32, %c0_i32_0 : i32, i32
  }
  func.func @transform_9(%arg0: i32) -> (i32, i32) {
    %c0_i32 = arith.constant 0 : i32
    %c0_i32_0 = arith.constant 0 : i32
    return %arg0, %c0_i32 : i32, i32
  }
}

module attributes {stable_mosaic.version = 11 : i64} {
  func.func @_fans_kernel(%arg0: i32, %arg1: memref<16x4xf32, #tpu.memory_space<vmem>>, %arg2: memref<16x3xf32, #tpu.memory_space<vmem>>, %arg3: memref<4x128xbf16, #tpu.memory_space<vmem>>, %arg4: memref<3x128xbf16, #tpu.memory_space<vmem>>, %arg5: memref<1x128xf32, #tpu.memory_space<vmem>>, %arg6: memref<1x128x128xbf16, #tpu.memory_space<vmem>>, %arg7: memref<1x128xf32, #tpu.memory_space<vmem>>, %arg8: memref<128x128xbf16, #tpu.memory_space<vmem>>, %arg9: memref<1x128xf32, #tpu.memory_space<vmem>>, %arg10: memref<16x128xf32, #tpu.memory_space<vmem>>) attributes {dimension_semantics = [#tpu.dimension_semantics<parallel>], iteration_bounds = array<i64: 1>, scalar_prefetch = 0 : i64, scratch_operands = 0 : i64, tpu.core_type = #tpu.core_type<tc>, window_params = [{transform_indices = @transform_0, window_bounds = array<i64: 16, 4>}, {transform_indices = @transform_1, window_bounds = array<i64: 16, 3>}, {pipeline_mode = #tpu.pipeline_mode<synchronous>, transform_indices = @transform_2, window_bounds = array<i64: 4, 128>}, {pipeline_mode = #tpu.pipeline_mode<synchronous>, transform_indices = @transform_3, window_bounds = array<i64: 3, 128>}, {pipeline_mode = #tpu.pipeline_mode<synchronous>, transform_indices = @transform_4, window_bounds = array<i64: 1, 128>}, {pipeline_mode = #tpu.pipeline_mode<synchronous>, transform_indices = @transform_5, window_bounds = array<i64: 1, 128, 128>}, {pipeline_mode = #tpu.pipeline_mode<synchronous>, transform_indices = @transform_6, window_bounds = array<i64: 1, 128>}, {pipeline_mode = #tpu.pipeline_mode<synchronous>, transform_indices = @transform_7, window_bounds = array<i64: 128, 128>}, {pipeline_mode = #tpu.pipeline_mode<synchronous>, transform_indices = @transform_8, window_bounds = array<i64: 1, 128>}, {transform_indices = @transform_9, window_bounds = array<i64: 16, 128>}]} {
    %c0 = arith.constant 0 : index
    %c0_0 = arith.constant 0 : index
    %0 = vector.load %arg1[%c0, %c0_0] : memref<16x4xf32, #tpu.memory_space<vmem>>, vector<16x4xf32>
    %1 = arith.truncf %0 : vector<16x4xf32> to vector<16x4xbf16>
    %c0_1 = arith.constant 0 : index
    %c0_2 = arith.constant 0 : index
    %2 = vector.load %arg2[%c0_1, %c0_2] : memref<16x3xf32, #tpu.memory_space<vmem>>, vector<16x3xf32>
    %3 = arith.truncf %2 : vector<16x3xf32> to vector<16x3xbf16>
    %c0_3 = arith.constant 0 : index
    %c0_4 = arith.constant 0 : index
    %4 = vector.load %arg3[%c0_3, %c0_4] : memref<4x128xbf16, #tpu.memory_space<vmem>>, vector<4x128xbf16>
    %cst = arith.constant dense<0.000000e+00> : vector<16x128xf32>
    %5 = tpu.matmul %1, %4, %cst {dimension_numbers = #tpu.dot_dimension_numbers<[1], [0], [0], [1], [0, 0, 1, 1], [], []>} : vector<16x4xbf16>, vector<4x128xbf16>, vector<16x128xf32> -> vector<16x128xf32>
    %c0_5 = arith.constant 0 : index
    %c0_6 = arith.constant 0 : index
    %6 = vector.load %arg4[%c0_5, %c0_6] : memref<3x128xbf16, #tpu.memory_space<vmem>>, vector<3x128xbf16>
    %cst_7 = arith.constant dense<0.000000e+00> : vector<16x128xf32>
    %7 = tpu.matmul %3, %6, %cst_7 {dimension_numbers = #tpu.dot_dimension_numbers<[1], [0], [0], [1], [0, 0, 1, 1], [], []>} : vector<16x3xbf16>, vector<3x128xbf16>, vector<16x128xf32> -> vector<16x128xf32>
    %8 = arith.addf %5, %7 : vector<16x128xf32>
    %c0_8 = arith.constant 0 : index
    %c0_9 = arith.constant 0 : index
    %9 = vector.load %arg5[%c0_8, %c0_9] : memref<1x128xf32, #tpu.memory_space<vmem>>, vector<1x128xf32>
    %10 = vector.broadcast %9 : vector<1x128xf32> to vector<16x128xf32>
    %11 = arith.addf %8, %10 : vector<16x128xf32>
    %12 = math.tanh %11 : vector<16x128xf32>
    %13 = arith.truncf %12 : vector<16x128xf32> to vector<16x128xbf16>
    %c0_10 = arith.constant 0 : index
    %c0_11 = arith.constant 0 : index
    %c0_12 = arith.constant 0 : index
    %14 = vector.load %arg6[%c0_10, %c0_11, %c0_12] : memref<1x128x128xbf16, #tpu.memory_space<vmem>>, vector<1x128x128xbf16>
    %15 = vector.shape_cast %14 : vector<1x128x128xbf16> to vector<128x128xbf16>
    %cst_13 = arith.constant dense<0.000000e+00> : vector<16x128xf32>
    %16 = tpu.matmul %13, %15, %cst_13 {dimension_numbers = #tpu.dot_dimension_numbers<[1], [0], [0], [1], [0, 0, 1, 1], [], []>} : vector<16x128xbf16>, vector<128x128xbf16>, vector<16x128xf32> -> vector<16x128xf32>
    %c0_14 = arith.constant 0 : index
    %c0_15 = arith.constant 0 : index
    %17 = vector.load %arg7[%c0_14, %c0_15] : memref<1x128xf32, #tpu.memory_space<vmem>>, vector<1x128xf32>
    %18 = vector.broadcast %17 : vector<1x128xf32> to vector<16x128xf32>
    %19 = arith.addf %16, %18 : vector<16x128xf32>
    %20 = math.tanh %19 : vector<16x128xf32>
    %21 = arith.truncf %20 : vector<16x128xf32> to vector<16x128xbf16>
    %c0_16 = arith.constant 0 : index
    %c0_17 = arith.constant 0 : index
    %22 = vector.load %arg8[%c0_16, %c0_17] : memref<128x128xbf16, #tpu.memory_space<vmem>>, vector<128x128xbf16>
    %cst_18 = arith.constant dense<0.000000e+00> : vector<16x128xf32>
    %23 = tpu.matmul %21, %22, %cst_18 {dimension_numbers = #tpu.dot_dimension_numbers<[1], [0], [0], [1], [0, 0, 1, 1], [], []>} : vector<16x128xbf16>, vector<128x128xbf16>, vector<16x128xf32> -> vector<16x128xf32>
    %c0_19 = arith.constant 0 : index
    %c0_20 = arith.constant 0 : index
    %24 = vector.load %arg9[%c0_19, %c0_20] : memref<1x128xf32, #tpu.memory_space<vmem>>, vector<1x128xf32>
    %25 = vector.broadcast %24 : vector<1x128xf32> to vector<16x128xf32>
    %26 = arith.addf %23, %25 : vector<16x128xf32>
    %c0_21 = arith.constant 0 : index
    %c0_22 = arith.constant 0 : index
    %27 = vector.load %arg10[%c0_21, %c0_22] : memref<16x128xf32, #tpu.memory_space<vmem>>, vector<16x128xf32>
    tpu.vector_store %arg10[%c0_21, %c0_22], %26 {strides = array<i32>} : memref<16x128xf32, #tpu.memory_space<vmem>>, vector<16x128xf32>,
    return
  }
  func.func @transform_0(%arg0: i32) -> (i32, i32) {
    %c0_i32 = arith.constant 0 : i32
    %c0_i32_0 = arith.constant 0 : i32
    return %arg0, %c0_i32 : i32, i32
  }
  func.func @transform_1(%arg0: i32) -> (i32, i32) {
    %c0_i32 = arith.constant 0 : i32
    %c0_i32_0 = arith.constant 0 : i32
    return %arg0, %c0_i32 : i32, i32
  }
  func.func @transform_2(%arg0: i32) -> (i32, i32) {
    %c0_i32 = arith.constant 0 : i32
    %c0_i32_0 = arith.constant 0 : i32
    %c0_i32_1 = arith.constant 0 : i32
    return %c0_i32, %c0_i32_0 : i32, i32
  }
  func.func @transform_3(%arg0: i32) -> (i32, i32) {
    %c0_i32 = arith.constant 0 : i32
    %c0_i32_0 = arith.constant 0 : i32
    %c0_i32_1 = arith.constant 0 : i32
    return %c0_i32, %c0_i32_0 : i32, i32
  }
  func.func @transform_4(%arg0: i32) -> (i32, i32) {
    %c0_i32 = arith.constant 0 : i32
    %c0_i32_0 = arith.constant 0 : i32
    %c0_i32_1 = arith.constant 0 : i32
    return %c0_i32, %c0_i32_0 : i32, i32
  }
  func.func @transform_5(%arg0: i32) -> (i32, i32, i32) {
    %c0_i32 = arith.constant 0 : i32
    %c0_i32_0 = arith.constant 0 : i32
    %c0_i32_1 = arith.constant 0 : i32
    %c0_i32_2 = arith.constant 0 : i32
    return %c0_i32, %c0_i32_0, %c0_i32_1 : i32, i32, i32
  }
  func.func @transform_6(%arg0: i32) -> (i32, i32) {
    %c0_i32 = arith.constant 0 : i32
    %c0_i32_0 = arith.constant 0 : i32
    %c0_i32_1 = arith.constant 0 : i32
    return %c0_i32, %c0_i32_0 : i32, i32
  }
  func.func @transform_7(%arg0: i32) -> (i32, i32) {
    %c0_i32 = arith.constant 0 : i32
    %c0_i32_0 = arith.constant 0 : i32
    %c0_i32_1 = arith.constant 0 : i32
    return %c0_i32, %c0_i32_0 : i32, i32
  }
  func.func @transform_8(%arg0: i32) -> (i32, i32) {
    %c0_i32 = arith.constant 0 : i32
    %c0_i32_0 = arith.constant 0 : i32
    %c0_i32_1 = arith.constant 0 : i32
    return %c0_i32, %c0_i32_0 : i32, i32
  }
  func.func @transform_9(%arg0: i32) -> (i32, i32) {
    %c0_i32 = arith.constant 0 : i32
    %c0_i32_0 = arith.constant 0 : i32
    return %arg0, %c0_i32 : i32, i32
  }
}

</mosaic_0001>

<llo_original>
// kernel: tpu_custom_call.1
$region0: #{tpu_custom_call.1}
  #allocation0 [shape = 'u32[]', space=smem, size = 0x4, offset = 0x4, fixed_abs, tag = 'smem constant byte address 0x4 - core index']
  #allocation1 [shape = 'u32[144,128]{1,0:T(1,128)}', space=vmem, size = 0x12000, scoped, tag = 'internal scratch']
  %s0 = inlined_call_operand.vmem [shape: f32[16,4], index: 0, kind: input, shape index: {}]
  %s1 = inlined_call_operand.vmem [shape: f32[16,3], index: 1, kind: input, shape index: {}]
  %s2 = inlined_call_operand.vmem [shape: bf16[4,128], index: 2, kind: input, shape index: {}]
  %s3 = inlined_call_operand.vmem [shape: bf16[3,128], index: 3, kind: input, shape index: {}]
  %s4 = inlined_call_operand.vmem [shape: f32[1,128], index: 4, kind: input, shape index: {}]
  %s5 = inlined_call_operand.hbm [shape: bf16[1,128,128], index: 5, kind: input, shape index: {}]
  %s6 = inlined_call_operand.vmem [shape: f32[1,128], index: 6, kind: input, shape index: {}]
  %s7 = inlined_call_operand.hbm [shape: bf16[128,128], index: 7, kind: input, shape index: {}]
  %s8 = inlined_call_operand.vmem [shape: f32[1,128], index: 8, kind: input, shape index: {}]
  %s9 = inlined_call_operand.hbm [shape: f32[16,128], index: 9, kind: output, shape index: {}]
  %s10 = sld [smem:[#allocation0]]
  $region54: #{tpu_custom_call.1} parent=0
    _
  %s12 = ssub.s32 1, %s10
  %s13 = scalar_select 0, %s12, %s10
  $region1: #{tpu_custom_call.1} parent=0
    #allocation2 [shape = 'u8[32768]{0}', space=vmem, size = 0x8000, scoped, tag = 'input window, operand 5, single buffered']
    #allocation3 [shape = 's32[1]{0}', space=sflag, size = 0x4, scoped, tag = 'scoped memory for tpu_custom_call.1']
    #allocation4 [shape = 's32[1]{0}', space=sflag, size = 0x4, scoped, tag = 'scoped memory for tpu_custom_call.1']
    #allocation5 [shape = 'u8[32768]{0}', space=vmem, size = 0x8000, scoped, tag = 'input window, operand 7, single buffered']
    #allocation6 [shape = 's32[1]{0}', space=sflag, size = 0x4, scoped, tag = 'scoped memory for tpu_custom_call.1']
    #allocation7 [shape = 'u8[8192]{0}', space=vmem, size = 0x2000, scoped, tag = 'output window, operand 0, single buffered']
    %14 = vsyncpa [#allocation3], 0
    %15 = vsyncpa [#allocation6], 0
    %16 = vsyncpa [#allocation4], 0
    // Predicated region
    $region2: #{tpu_custom_call.1} parent=1 // pred_check
      _
    $region3: #{tpu_custom_call.1} parent=1 // pred_check_branch
      %18 = sbr.rel (0) target = $region5
    $region4: #{tpu_custom_call.1} parent=1 // pred_region
      _
    $region5: #{tpu_custom_call.1} parent=1 // pred_fallthru
      _
    // Predicated region
    $region6: #{tpu_custom_call.1} parent=1 // pred_check
      _
    $region7: #{tpu_custom_call.1} parent=1 // pred_check_branch
      %20 = sbr.rel (0) target = $region9
    $region8: #{tpu_custom_call.1} parent=1 // pred_region
      _
    $region9: #{tpu_custom_call.1} parent=1 // pred_fallthru
      _
    // Predicated region
    $region10: #{tpu_custom_call.1} parent=1 // pred_check
      _
    $region11: #{tpu_custom_call.1} parent=1 // pred_check_branch
      %22 = sbr.rel (0) target = $region13
    $region12: #{tpu_custom_call.1} parent=1 // pred_region
      _
    $region13: #{tpu_custom_call.1} parent=1 // pred_fallthru
      _
    // Predicated region
    $region14: #{tpu_custom_call.1} parent=1 // pred_check
      _
    $region15: #{tpu_custom_call.1} parent=1 // pred_check_branch
      %24 = sbr.rel (0) target = $region17
    $region16: #{tpu_custom_call.1} parent=1 // pred_region
      _
    $region17: #{tpu_custom_call.1} parent=1 // pred_fallthru
      _
    // Predicated region
    $region18: #{tpu_custom_call.1} parent=1 // pred_check
      _
    $region19: #{tpu_custom_call.1} parent=1 // pred_check_branch
      %26 = sbr.rel (0) target = $region21
    $region20: #{tpu_custom_call.1} parent=1 // pred_region
      _
    $region21: #{tpu_custom_call.1} parent=1 // pred_fallthru
      _
    // Predicated region
    $region22: #{tpu_custom_call.1} parent=1 // pred_check
      _
    $region23: #{tpu_custom_call.1} parent=1 // pred_check_branch
      %28 = sbr.rel (0) target = $region25
    $region24: #{tpu_custom_call.1} parent=1 // pred_region
      %s30 = ssub.s32 1024, 1024
      %31 = vsyncadd [#allocation3], %s30
      %s32 = sshll.u32 [#allocation2], 4
      %s33 = int_to_ptr.vmem [resolvable:$true] %s32
      %38 = dma.hbm_to_vmem [thread:$0]  %s5, 1024, %s33, [#allocation3], 64, 64, 4
    $region25: #{tpu_custom_call.1} parent=1 // pred_fallthru
      _
    // Predicated region
    $region26: #{tpu_custom_call.1} parent=1 // pred_check
      _
    $region27: #{tpu_custom_call.1} parent=1 // pred_check_branch
      %40 = sbr.rel (0) target = $region29
    $region28: #{tpu_custom_call.1} parent=1 // pred_region
      _
    $region29: #{tpu_custom_call.1} parent=1 // pred_fallthru
      _
    // Predicated region
    $region30: #{tpu_custom_call.1} parent=1 // pred_check
      _
    $region31: #{tpu_custom_call.1} parent=1 // pred_check_branch
      %42 = sbr.rel (0) target = $region33
    $region32: #{tpu_custom_call.1} parent=1 // pred_region
      %s44 = ssub.s32 1024, 1024
      %45 = vsyncadd [#allocation6], %s44
      %s46 = sshll.u32 [#allocation5], 4
      %s47 = int_to_ptr.vmem [resolvable:$true] %s46
      %52 = dma.hbm_to_vmem [thread:$0]  %s7, 1024, %s47, [#allocation6], 64, 64, 4
    $region33: #{tpu_custom_call.1} parent=1 // pred_fallthru
      _
    // Predicated region
    $region34: #{tpu_custom_call.1} parent=1 // pred_check
      _
    $region35: #{tpu_custom_call.1} parent=1 // pred_check_branch
      %54 = sbr.rel (0) target = $region37
    $region36: #{tpu_custom_call.1} parent=1 // pred_region
      _
    $region37: #{tpu_custom_call.1} parent=1 // pred_fallthru
      _
    // Predicated region
    $region38: #{tpu_custom_call.1} parent=1 // pred_check
      _
    $region39: #{tpu_custom_call.1} parent=1 // pred_check_branch
      %56 = sbr.rel (0) target = $region41
    $region40: #{tpu_custom_call.1} parent=1 // pred_region
      %57 = dma.done [#allocation3], 1024
    $region41: #{tpu_custom_call.1} parent=1 // pred_fallthru
      _
    // Predicated region
    $region42: #{tpu_custom_call.1} parent=1 // pred_check
      _
    $region43: #{tpu_custom_call.1} parent=1 // pred_check_branch
      %59 = sbr.rel (0) target = $region45
    $region44: #{tpu_custom_call.1} parent=1 // pred_region
      %60 = dma.done [#allocation6], 1024
    $region45: #{tpu_custom_call.1} parent=1 // pred_fallthru
      _
    %v62 = vld [vmem:[%s0] sm:$0xff]
    %v63 = vld [vmem:[%s0 + $0x8] sm:$0xff]
    %v64 = vpack.c.bf16 %v63, %v62
    %v65 = vld [vmem:[%s1] sm:$0xff]
    %v66 = vld [vmem:[%s1 + $0x8] sm:$0xff]
    %v67 = vpack.c.bf16 %v66, %v65
    %v68 = vld [vmem:[%s2] sm:$0x3]
    %v69 = vld [vmem:[%s3] sm:$0x3]
    %vm70 = vcmask 23552
    %v72 = vsel %vm70, %v67, 0
    %vm74 = vcmask 1040384
    %vm75 = vcmask 1041408
    %v76 = vsel %vm74, 4294967295, 65535
    %v77 = vsel %vm75, %v76, 0
    %v79 = vand.u32 %v69, %v77
    %81 = vmatprep.subr.bf16.mxu0 0
    %82 = vmatpush1.bf16.msra.mxu0 0
    %83 = vmatprep.subr.bf16.mxu0 0
    %84 = vmatpush1.bf16.msra.mxu0 0
    %85 = vmatprep.subr.bf16.mxu0 0
    %86 = vmatpush1.bf16.msra.mxu0 0
    %87 = vmatprep.subr.bf16.mxu0 0
    %88 = vmatpush1.bf16.msra.mxu0 0
    %89 = vmatprep.subr.bf16.mxu0 0
    %90 = vmatpush1.bf16.msra.mxu0 0
    %91 = vmatprep.subr.bf16.mxu0 0
    %92 = vmatpush1.bf16.msra.mxu0 0
    %93 = vmatprep.subr.bf16.mxu0 0
    %94 = vmatpush1.bf16.msra.mxu0 0
    %95 = vmatprep.subr.bf16.mxu0 0
    %96 = vmatpush1.bf16.msra.mxu0 %v79
    %97 = vmatprep.subr.bf16.mxu0 0
    %98 = vmatpush2.bf16.msra.mxu0 0
    %99 = vmatprep.subr.bf16.mxu0 0
    %100 = vmatpush2.bf16.msra.mxu0 0
    %101 = vmatprep.subr.bf16.mxu0 0
    %102 = vmatpush2.bf16.msra.mxu0 0
    %103 = vmatprep.subr.bf16.mxu0 0
    %104 = vmatpush2.bf16.msra.mxu0 0
    %105 = vmatprep.subr.bf16.mxu0 0
    %106 = vmatpush2.bf16.msra.mxu0 0
    %107 = vmatprep.subr.bf16.mxu0 0
    %108 = vmatpush2.bf16.msra.mxu0 0
    %109 = vmatprep.subr.bf16.mxu0 0
    %110 = vmatpush2.bf16.msra.mxu0 0
    %111 = vmatprep.subr.bf16.mxu0 0
    %112 = vmatpush2.bf16.msra.mxu0 0
    %113 = vmatprep.mubr.bf16.mxu0 0
    %114 = vmatmul.mubr.bf16.gmra.mxu0 %v72
    %v115 = vpop.f32.mrf.mxu0
    %v116 = vadd.f32 0.0, %v115
    %v117 = vpop.f32.mrf.mxu0
    %v118 = vpop.f32.mrf.mxu0
    %v119 = vadd.f32 0.0, %v118
    %v120 = vpop.f32.mrf.mxu0
    %121 = vdwg.mxu0
    %vm122 = vcmask 31744
    %v124 = vsel %vm122, %v64, 0
    %v127 = vsel %vm75, %v68, 0
    %129 = vmatprep.subr.bf16.mxu0 0
    %130 = vmatpush1.bf16.msra.mxu0 0
    %131 = vmatprep.subr.bf16.mxu0 0
    %132 = vmatpush1.bf16.msra.mxu0 0
    %133 = vmatprep.subr.bf16.mxu0 0
    %134 = vmatpush1.bf16.msra.mxu0 0
    %135 = vmatprep.subr.bf16.mxu0 0
    %136 = vmatpush1.bf16.msra.mxu0 0
    %137 = vmatprep.subr.bf16.mxu0 0
    %138 = vmatpush1.bf16.msra.mxu0 0
    %139 = vmatprep.subr.bf16.mxu0 0
    %140 = vmatpush1.bf16.msra.mxu0 0
    %141 = vmatprep.subr.bf16.mxu0 0
    %142 = vmatpush1.bf16.msra.mxu0 0
    %143 = vmatprep.subr.bf16.mxu0 0
    %144 = vmatpush1.bf16.msra.mxu0 %v127
    %145 = vmatprep.subr.bf16.mxu0 0
    %146 = vmatpush2.bf16.msra.mxu0 0
    %147 = vmatprep.subr.bf16.mxu0 0
    %148 = vmatpush2.bf16.msra.mxu0 0
    %149 = vmatprep.subr.bf16.mxu0 0
    %150 = vmatpush2.bf16.msra.mxu0 0
    %151 = vmatprep.subr.bf16.mxu0 0
    %152 = vmatpush2.bf16.msra.mxu0 0
    %153 = vmatprep.subr.bf16.mxu0 0
    %154 = vmatpush2.bf16.msra.mxu0 0
    %155 = vmatprep.subr.bf16.mxu0 0
    %156 = vmatpush2.bf16.msra.mxu0 0
    %157 = vmatprep.subr.bf16.mxu0 0
    %158 = vmatpush2.bf16.msra.mxu0 0
    %159 = vmatprep.subr.bf16.mxu0 0
    %160 = vmatpush2.bf16.msra.mxu0 0
    %161 = vmatprep.mubr.bf16.mxu0 0
    %162 = vmatmul.mubr.bf16.gmra.mxu0 %v124
    %v163 = vpop.f32.mrf.mxu0
    %v164 = vadd.f32 %v116, %v163
    %v165 = vpop.f32.mrf.mxu0
    %v166 = vpop.f32.mrf.mxu0
    %v167 = vadd.f32 %v119, %v166
    %v168 = vpop.f32.mrf.mxu0
    %169 = vdwg.mxu0
    %v170 = vld [vmem:[%s4] sm:$0x1]
    %v172 = vlaneseq
    %v173 = vshrl.u32 %v172, 7
    %v174 = vsub.s32 0, %v173
    %v175 = vrot.slane %v170, %v174
    %v177 = vadd.f32 %v164, %v175
    %v178 = vadd.f32 %v167, %v175
    %v179 = vtanh.pop %v177
    %v180 = vtanh.pop %v178
    %v181 = vpack.c.bf16 %v180, %v179
    %v182 = vld [vmem:[#allocation2] sm:$0xf]
    %v183 = vld [vmem:[#allocation2 + $0x4] sm:$0xf]
    %v184 = vld [vmem:[#allocation2 + $0x8] sm:$0xf]
    %v185 = vld [vmem:[#allocation2 + $0xc] sm:$0xf]
    %v186 = vld [vmem:[#allocation2 + $0x10] sm:$0xf]
    %v187 = vld [vmem:[#allocation2 + $0x14] sm:$0xf]
    %v188 = vld [vmem:[#allocation2 + $0x18] sm:$0xf]
    %v189 = vld [vmem:[#allocation2 + $0x1c] sm:$0xf]
    %v190 = vld [vmem:[#allocation2 + $0x20] sm:$0xf]
    %v191 = vld [vmem:[#allocation2 + $0x24] sm:$0xf]
    %v192 = vld [vmem:[#allocation2 + $0x28] sm:$0xf]
    %v193 = vld [vmem:[#allocation2 + $0x2c] sm:$0xf]
    %v194 = vld [vmem:[#allocation2 + $0x30] sm:$0xf]
    %v195 = vld [vmem:[#allocation2 + $0x34] sm:$0xf]
    %v196 = vld [vmem:[#allocation2 + $0x38] sm:$0xf]
    %v197 = vld [vmem:[#allocation2 + $0x3c] sm:$0xf]
    %v198 = vld [vmem:[%s6] sm:$0x1]
    %v200 = vlaneseq
    %v201 = vshrl.u32 %v200, 7
    %v202 = vsub.s32 0, %v201
    %v203 = vrot.slane %v198, %v202
    %v221 = vunpack.c.l.b16 %v182
    %v222 = vunpack.c.l.b16 %v183
    %v223 = vunpack.c.l.b16 %v184
    %v224 = vunpack.c.l.b16 %v185
    %v225 = vunpack.c.l.b16 %v186
    %v226 = vunpack.c.l.b16 %v187
    %v227 = vunpack.c.l.b16 %v188
    %v228 = vunpack.c.l.b16 %v189
    %v229 = vunpack.c.l.b16 %v190
    %v230 = vunpack.c.l.b16 %v191
    %v231 = vunpack.c.l.b16 %v192
    %v232 = vunpack.c.l.b16 %v193
    %v233 = vunpack.c.l.b16 %v194
    %v234 = vunpack.c.l.b16 %v195
    %v235 = vunpack.c.l.b16 %v196
    %v236 = vunpack.c.l.b16 %v197
    %v237 = vpack.c.b16 %v222, %v221
    %v238 = vpack.c.b16 %v224, %v223
    %v239 = vpack.c.b16 %v226, %v225
    %v240 = vpack.c.b16 %v228, %v227
    %v241 = vpack.c.b16 %v230, %v229
    %v242 = vpack.c.b16 %v232, %v231
    %v243 = vpack.c.b16 %v234, %v233
    %v244 = vpack.c.b16 %v236, %v235
    %253 = vmatprep.subr.bf16.mxu0 0
    %254 = vmatpush1.bf16.msra.mxu0 %v244
    %255 = vmatprep.subr.bf16.mxu0 0
    %256 = vmatpush1.bf16.msra.mxu0 %v243
    %257 = vmatprep.subr.bf16.mxu0 0
    %258 = vmatpush1.bf16.msra.mxu0 %v242
    %259 = vmatprep.subr.bf16.mxu0 0
    %260 = vmatpush1.bf16.msra.mxu0 %v241
    %261 = vmatprep.subr.bf16.mxu0 0
    %262 = vmatpush1.bf16.msra.mxu0 %v240
    %263 = vmatprep.subr.bf16.mxu0 0
    %264 = vmatpush1.bf16.msra.mxu0 %v239
    %265 = vmatprep.subr.bf16.mxu0 0
    %266 = vmatpush1.bf16.msra.mxu0 %v238
    %267 = vmatprep.subr.bf16.mxu0 0
    %268 = vmatpush1.bf16.msra.mxu0 %v237
    %269 = vmatprep.subr.bf16.mxu0 0
    %270 = vmatpush2.bf16.msra.mxu0 0
    %271 = vmatprep.subr.bf16.mxu0 0
    %272 = vmatpush2.bf16.msra.mxu0 0
    %273 = vmatprep.subr.bf16.mxu0 0
    %274 = vmatpush2.bf16.msra.mxu0 0
    %275 = vmatprep.subr.bf16.mxu0 0
    %276 = vmatpush2.bf16.msra.mxu0 0
    %277 = vmatprep.subr.bf16.mxu0 0
    %278 = vmatpush2.bf16.msra.mxu0 0
    %279 = vmatprep.subr.bf16.mxu0 0
    %280 = vmatpush2.bf16.msra.mxu0 0
    %281 = vmatprep.subr.bf16.mxu0 0
    %282 = vmatpush2.bf16.msra.mxu0 0
    %283 = vmatprep.subr.bf16.mxu0 0
    %284 = vmatpush2.bf16.msra.mxu0 0
    %285 = vmatprep.mubr.bf16.mxu0 0
    %286 = vmatmul.mubr.bf16.gmra.mxu0 %v181
    %v287 = vpop.f32.mrf.mxu0
    %v288 = vadd.f32 %v203, %v287
    %v289 = vpop.f32.mrf.mxu0
    %v290 = vpop.f32.mrf.mxu0
    %v291 = vadd.f32 %v203, %v290
    %v292 = vpop.f32.mrf.mxu0
    %293 = vdwg.mxu0
    %v294 = vtanh.pop %v288
    %v295 = vtanh.pop %v291
    %v296 = vpack.c.bf16 %v295, %v294
    %v297 = vld [vmem:[#allocation5] sm:$0xf]
    %v298 = vld [vmem:[#allocation5 + $0x4] sm:$0xf]
    %v299 = vld [vmem:[#allocation5 + $0x8] sm:$0xf]
    %v300 = vld [vmem:[#allocation5 + $0xc] sm:$0xf]
    %v301 = vld [vmem:[#allocation5 + $0x10] sm:$0xf]
    %v302 = vld [vmem:[#allocation5 + $0x14] sm:$0xf]
    %v303 = vld [vmem:[#allocation5 + $0x18] sm:$0xf]
    %v304 = vld [vmem:[#allocation5 + $0x1c] sm:$0xf]
    %v305 = vld [vmem:[#allocation5 + $0x20] sm:$0xf]
    %v306 = vld [vmem:[#allocation5 + $0x24] sm:$0xf]
    %v307 = vld [vmem:[#allocation5 + $0x28] sm:$0xf]
    %v308 = vld [vmem:[#allocation5 + $0x2c] sm:$0xf]
    %v309 = vld [vmem:[#allocation5 + $0x30] sm:$0xf]
    %v310 = vld [vmem:[#allocation5 + $0x34] sm:$0xf]
    %v311 = vld [vmem:[#allocation5 + $0x38] sm:$0xf]
    %v312 = vld [vmem:[#allocation5 + $0x3c] sm:$0xf]
    %v313 = vld [vmem:[%s8] sm:$0x1]
    %v315 = vlaneseq
    %v316 = vshrl.u32 %v315, 7
    %v317 = vsub.s32 0, %v316
    %v318 = vrot.slane %v313, %v317
    %v336 = vunpack.c.l.b16 %v297
    %v337 = vunpack.c.l.b16 %v298
    %v338 = vunpack.c.l.b16 %v299
    %v339 = vunpack.c.l.b16 %v300
    %v340 = vunpack.c.l.b16 %v301
    %v341 = vunpack.c.l.b16 %v302
    %v342 = vunpack.c.l.b16 %v303
    %v343 = vunpack.c.l.b16 %v304
    %v344 = vunpack.c.l.b16 %v305
    %v345 = vunpack.c.l.b16 %v306
    %v346 = vunpack.c.l.b16 %v307
    %v347 = vunpack.c.l.b16 %v308
    %v348 = vunpack.c.l.b16 %v309
    %v349 = vunpack.c.l.b16 %v310
    %v350 = vunpack.c.l.b16 %v311
    %v351 = vunpack.c.l.b16 %v312
    %v352 = vpack.c.b16 %v337, %v336
    %v353 = vpack.c.b16 %v339, %v338
    %v354 = vpack.c.b16 %v341, %v340
    %v355 = vpack.c.b16 %v343, %v342
    %v356 = vpack.c.b16 %v345, %v344
    %v357 = vpack.c.b16 %v347, %v346
    %v358 = vpack.c.b16 %v349, %v348
    %v359 = vpack.c.b16 %v351, %v350
    %368 = vmatprep.subr.bf16.mxu0 0
    %369 = vmatpush1.bf16.msra.mxu0 %v359
    %370 = vmatprep.subr.bf16.mxu0 0
    %371 = vmatpush1.bf16.msra.mxu0 %v358
    %372 = vmatprep.subr.bf16.mxu0 0
    %373 = vmatpush1.bf16.msra.mxu0 %v357
    %374 = vmatprep.subr.bf16.mxu0 0
    %375 = vmatpush1.bf16.msra.mxu0 %v356
    %376 = vmatprep.subr.bf16.mxu0 0
    %377 = vmatpush1.bf16.msra.mxu0 %v355
    %378 = vmatprep.subr.bf16.mxu0 0
    %379 = vmatpush1.bf16.msra.mxu0 %v354
    %380 = vmatprep.subr.bf16.mxu0 0
    %381 = vmatpush1.bf16.msra.mxu0 %v353
    %382 = vmatprep.subr.bf16.mxu0 0
    %383 = vmatpush1.bf16.msra.mxu0 %v352
    %384 = vmatprep.subr.bf16.mxu0 0
    %385 = vmatpush2.bf16.msra.mxu0 0
    %386 = vmatprep.subr.bf16.mxu0 0
    %387 = vmatpush2.bf16.msra.mxu0 0
    %388 = vmatprep.subr.bf16.mxu0 0
    %389 = vmatpush2.bf16.msra.mxu0 0
    %390 = vmatprep.subr.bf16.mxu0 0
    %391 = vmatpush2.bf16.msra.mxu0 0
    %392 = vmatprep.subr.bf16.mxu0 0
    %393 = vmatpush2.bf16.msra.mxu0 0
    %394 = vmatprep.subr.bf16.mxu0 0
    %395 = vmatpush2.bf16.msra.mxu0 0
    %396 = vmatprep.subr.bf16.mxu0 0
    %397 = vmatpush2.bf16.msra.mxu0 0
    %398 = vmatprep.subr.bf16.mxu0 0
    %399 = vmatpush2.bf16.msra.mxu0 0
    %400 = vmatprep.mubr.bf16.mxu0 0
    %401 = vmatmul.mubr.bf16.gmra.mxu0 %v296
    %v402 = vpop.f32.mrf.mxu0
    %v403 = vadd.f32 %v318, %v402
    %v404 = vpop.f32.mrf.mxu0
    %v405 = vpop.f32.mrf.mxu0
    %v406 = vadd.f32 %v318, %v405
    %v407 = vpop.f32.mrf.mxu0
    %408 = vdwg.mxu0
    %409 = vst [vmem:[#allocation7] sm:$0xff] %v403
    %410 = vst [vmem:[#allocation7 + $0x8] sm:$0xff] %v406
    // Predicated region
    $region46: #{tpu_custom_call.1} parent=1 // pred_check
      _
    $region47: #{tpu_custom_call.1} parent=1 // pred_check_branch
      %412 = sbr.rel (0) target = $region49
    $region48: #{tpu_custom_call.1} parent=1 // pred_region
      %s414 = ssub.s32 256, 256
      %415 = vsyncadd [#allocation4], %s414
      %s416 = sshll.u32 [#allocation7], 4
      %s417 = int_to_ptr.vmem [resolvable:$true] %s416
      %422 = dma.vmem_to_hbm [thread:$0]  %s417, 256, %s9, [#allocation4], 128, 128, 8
    $region49: #{tpu_custom_call.1} parent=1 // pred_fallthru
      _
    // Predicated region
    $region50: #{tpu_custom_call.1} parent=1 // pred_check
      _
    $region51: #{tpu_custom_call.1} parent=1 // pred_check_branch
      %424 = sbr.rel (0) target = $region53
    $region52: #{tpu_custom_call.1} parent=1 // pred_region
      %425 = dma.done [#allocation4], 256
    $region53: #{tpu_custom_call.1} parent=1 // pred_fallthru
      _
    %426 = vsyncpa [#allocation3], 1
    %427 = vsyncpa [#allocation6], 1
    %428 = vsyncpa [#allocation4], 1

// kernel: tpu_custom_call.1
$region0: #{tpu_custom_call.1}
  #allocation0 [shape = 'u32[]', space=smem, size = 0x4, offset = 0x4, fixed_abs, tag = 'smem constant byte address 0x4 - core index']
  #allocation1 [shape = 'u32[144,128]{1,0:T(1,128)}', space=vmem, size = 0x12000, scoped, tag = 'internal scratch']
  %s0 = inlined_call_operand.vmem [shape: f32[16,4], index: 0, kind: input, shape index: {}]
  %s1 = inlined_call_operand.vmem [shape: f32[16,3], index: 1, kind: input, shape index: {}]
  %s2 = inlined_call_operand.vmem [shape: bf16[4,128], index: 2, kind: input, shape index: {}]
  %s3 = inlined_call_operand.vmem [shape: bf16[3,128], index: 3, kind: input, shape index: {}]
  %s4 = inlined_call_operand.vmem [shape: f32[1,128], index: 4, kind: input, shape index: {}]
  %s5 = inlined_call_operand.hbm [shape: bf16[1,128,128], index: 5, kind: input, shape index: {}]
  %s6 = inlined_call_operand.vmem [shape: f32[1,128], index: 6, kind: input, shape index: {}]
  %s7 = inlined_call_operand.hbm [shape: bf16[128,128], index: 7, kind: input, shape index: {}]
  %s8 = inlined_call_operand.vmem [shape: f32[1,128], index: 8, kind: input, shape index: {}]
  %s9 = inlined_call_operand.hbm [shape: f32[16,128], index: 9, kind: output, shape index: {}]
  %s10 = sld [smem:[#allocation0]]
  $region54: #{tpu_custom_call.1} parent=0
    _
  %s12 = ssub.s32 1, %s10
  %s13 = scalar_select 0, %s12, %s10
  $region1: #{tpu_custom_call.1} parent=0
    #allocation2 [shape = 'u8[32768]{0}', space=vmem, size = 0x8000, scoped, tag = 'input window, operand 5, single buffered']
    #allocation3 [shape = 's32[1]{0}', space=sflag, size = 0x4, scoped, tag = 'scoped memory for tpu_custom_call.1']
    #allocation4 [shape = 's32[1]{0}', space=sflag, size = 0x4, scoped, tag = 'scoped memory for tpu_custom_call.1']
    #allocation5 [shape = 'u8[32768]{0}', space=vmem, size = 0x8000, scoped, tag = 'input window, operand 7, single buffered']
    #allocation6 [shape = 's32[1]{0}', space=sflag, size = 0x4, scoped, tag = 'scoped memory for tpu_custom_call.1']
    #allocation7 [shape = 'u8[8192]{0}', space=vmem, size = 0x2000, scoped, tag = 'output window, operand 0, single buffered']
    %14 = vsyncpa [#allocation3], 0
    %15 = vsyncpa [#allocation6], 0
    %16 = vsyncpa [#allocation4], 0
    // Predicated region
    $region2: #{tpu_custom_call.1} parent=1 // pred_check
      _
    $region3: #{tpu_custom_call.1} parent=1 // pred_check_branch
      %18 = sbr.rel (0) target = $region5
    $region4: #{tpu_custom_call.1} parent=1 // pred_region
      _
    $region5: #{tpu_custom_call.1} parent=1 // pred_fallthru
      _
    // Predicated region
    $region6: #{tpu_custom_call.1} parent=1 // pred_check
      _
    $region7: #{tpu_custom_call.1} parent=1 // pred_check_branch
      %20 = sbr.rel (0) target = $region9
    $region8: #{tpu_custom_call.1} parent=1 // pred_region
      _
    $region9: #{tpu_custom_call.1} parent=1 // pred_fallthru
      _
    // Predicated region
    $region10: #{tpu_custom_call.1} parent=1 // pred_check
      _
    $region11: #{tpu_custom_call.1} parent=1 // pred_check_branch
      %22 = sbr.rel (0) target = $region13
    $region12: #{tpu_custom_call.1} parent=1 // pred_region
      _
    $region13: #{tpu_custom_call.1} parent=1 // pred_fallthru
      _
    // Predicated region
    $region14: #{tpu_custom_call.1} parent=1 // pred_check
      _
    $region15: #{tpu_custom_call.1} parent=1 // pred_check_branch
      %24 = sbr.rel (0) target = $region17
    $region16: #{tpu_custom_call.1} parent=1 // pred_region
      _
    $region17: #{tpu_custom_call.1} parent=1 // pred_fallthru
      _
    // Predicated region
    $region18: #{tpu_custom_call.1} parent=1 // pred_check
      _
    $region19: #{tpu_custom_call.1} parent=1 // pred_check_branch
      %26 = sbr.rel (0) target = $region21
    $region20: #{tpu_custom_call.1} parent=1 // pred_region
      _
    $region21: #{tpu_custom_call.1} parent=1 // pred_fallthru
      _
    // Predicated region
    $region22: #{tpu_custom_call.1} parent=1 // pred_check
      _
    $region23: #{tpu_custom_call.1} parent=1 // pred_check_branch
      %28 = sbr.rel (0) target = $region25
    $region24: #{tpu_custom_call.1} parent=1 // pred_region
      %s30 = ssub.s32 1024, 1024
      %31 = vsyncadd [#allocation3], %s30
      %s32 = sshll.u32 [#allocation2], 4
      %s33 = int_to_ptr.vmem [resolvable:$true] %s32
      %38 = dma.hbm_to_vmem [thread:$0]  %s5, 1024, %s33, [#allocation3], 64, 64, 4
    $region25: #{tpu_custom_call.1} parent=1 // pred_fallthru
      _
    // Predicated region
    $region26: #{tpu_custom_call.1} parent=1 // pred_check
      _
    $region27: #{tpu_custom_call.1} parent=1 // pred_check_branch
      %40 = sbr.rel (0) target = $region29
    $region28: #{tpu_custom_call.1} parent=1 // pred_region
      _
    $region29: #{tpu_custom_call.1} parent=1 // pred_fallthru
      _
    // Predicated region
    $region30: #{tpu_custom_call.1} parent=1 // pred_check
      _
    $region31: #{tpu_custom_call.1} parent=1 // pred_check_branch
      %42 = sbr.rel (0) target = $region33
    $region32: #{tpu_custom_call.1} parent=1 // pred_region
      %s44 = ssub.s32 1024, 1024
      %45 = vsyncadd [#allocation6], %s44
      %s46 = sshll.u32 [#allocation5], 4
      %s47 = int_to_ptr.vmem [resolvable:$true] %s46
      %52 = dma.hbm_to_vmem [thread:$0]  %s7, 1024, %s47, [#allocation6], 64, 64, 4
    $region33: #{tpu_custom_call.1} parent=1 // pred_fallthru
      _
    // Predicated region
    $region34: #{tpu_custom_call.1} parent=1 // pred_check
      _
    $region35: #{tpu_custom_call.1} parent=1 // pred_check_branch
      %54 = sbr.rel (0) target = $region37
    $region36: #{tpu_custom_call.1} parent=1 // pred_region
      _
    $region37: #{tpu_custom_call.1} parent=1 // pred_fallthru
      _
    // Predicated region
    $region38: #{tpu_custom_call.1} parent=1 // pred_check
      _
    $region39: #{tpu_custom_call.1} parent=1 // pred_check_branch
      %56 = sbr.rel (0) target = $region41
    $region40: #{tpu_custom_call.1} parent=1 // pred_region
      %57 = dma.done [#allocation3], 1024
    $region41: #{tpu_custom_call.1} parent=1 // pred_fallthru
      _
    // Predicated region
    $region42: #{tpu_custom_call.1} parent=1 // pred_check
      _
    $region43: #{tpu_custom_call.1} parent=1 // pred_check_branch
      %59 = sbr.rel (0) target = $region45
    $region44: #{tpu_custom_call.1} parent=1 // pred_region
      %60 = dma.done [#allocation6], 1024
    $region45: #{tpu_custom_call.1} parent=1 // pred_fallthru
      _
    %v62 = vld [vmem:[%s0] sm:$0xff]
    %v63 = vld [vmem:[%s0 + $0x8] sm:$0xff]
    %v64 = vpack.c.bf16 %v63, %v62
    %v65 = vld [vmem:[%s1] sm:$0xff]
    %v66 = vld [vmem:[%s1 + $0x8] sm:$0xff]
    %v67 = vpack.c.bf16 %v66, %v65
    %v68 = vld [vmem:[%s2] sm:$0x3]
    %v69 = vld [vmem:[%s3] sm:$0x3]
    %vm70 = vcmask 23552
    %v72 = vsel %vm70, %v67, 0
    %vm74 = vcmask 1040384
    %vm75 = vcmask 1041408
    %v76 = vsel %vm74, 4294967295, 65535
    %v77 = vsel %vm75, %v76, 0
    %v79 = vand.u32 %v69, %v77
    %81 = vmatprep.subr.bf16.mxu0 0
    %82 = vmatpush1.bf16.msra.mxu0 0
    %83 = vmatprep.subr.bf16.mxu0 0
    %84 = vmatpush1.bf16.msra.mxu0 0
    %85 = vmatprep.subr.bf16.mxu0 0
    %86 = vmatpush1.bf16.msra.mxu0 0
    %87 = vmatprep.subr.bf16.mxu0 0
    %88 = vmatpush1.bf16.msra.mxu0 0
    %89 = vmatprep.subr.bf16.mxu0 0
    %90 = vmatpush1.bf16.msra.mxu0 0
    %91 = vmatprep.subr.bf16.mxu0 0
    %92 = vmatpush1.bf16.msra.mxu0 0
    %93 = vmatprep.subr.bf16.mxu0 0
    %94 = vmatpush1.bf16.msra.mxu0 0
    %95 = vmatprep.subr.bf16.mxu0 0
    %96 = vmatpush1.bf16.msra.mxu0 %v79
    %97 = vmatprep.subr.bf16.mxu0 0
    %98 = vmatpush2.bf16.msra.mxu0 0
    %99 = vmatprep.subr.bf16.mxu0 0
    %100 = vmatpush2.bf16.msra.mxu0 0
    %101 = vmatprep.subr.bf16.mxu0 0
    %102 = vmatpush2.bf16.msra.mxu0 0
    %103 = vmatprep.subr.bf16.mxu0 0
    %104 = vmatpush2.bf16.msra.mxu0 0
    %105 = vmatprep.subr.bf16.mxu0 0
    %106 = vmatpush2.bf16.msra.mxu0 0
    %107 = vmatprep.subr.bf16.mxu0 0
    %108 = vmatpush2.bf16.msra.mxu0 0
    %109 = vmatprep.subr.bf16.mxu0 0
    %110 = vmatpush2.bf16.msra.mxu0 0
    %111 = vmatprep.subr.bf16.mxu0 0
    %112 = vmatpush2.bf16.msra.mxu0 0
    %113 = vmatprep.mubr.bf16.mxu0 0
    %114 = vmatmul.mubr.bf16.gmra.mxu0 %v72
    %v115 = vpop.f32.mrf.mxu0
    %v116 = vadd.f32 0.0, %v115
    %v117 = vpop.f32.mrf.mxu0
    %v118 = vpop.f32.mrf.mxu0
    %v119 = vadd.f32 0.0, %v118
    %v120 = vpop.f32.mrf.mxu0
    %121 = vdwg.mxu0
    %vm122 = vcmask 31744
    %v124 = vsel %vm122, %v64, 0
    %v127 = vsel %vm75, %v68, 0
    %129 = vmatprep.subr.bf16.mxu0 0
    %130 = vmatpush1.bf16.msra.mxu0 0
    %131 = vmatprep.subr.bf16.mxu0 0
    %132 = vmatpush1.bf16.msra.mxu0 0
    %133 = vmatprep.subr.bf16.mxu0 0
    %134 = vmatpush1.bf16.msra.mxu0 0
    %135 = vmatprep.subr.bf16.mxu0 0
    %136 = vmatpush1.bf16.msra.mxu0 0
    %137 = vmatprep.subr.bf16.mxu0 0
    %138 = vmatpush1.bf16.msra.mxu0 0
    %139 = vmatprep.subr.bf16.mxu0 0
    %140 = vmatpush1.bf16.msra.mxu0 0
    %141 = vmatprep.subr.bf16.mxu0 0
    %142 = vmatpush1.bf16.msra.mxu0 0
    %143 = vmatprep.subr.bf16.mxu0 0
    %144 = vmatpush1.bf16.msra.mxu0 %v127
    %145 = vmatprep.subr.bf16.mxu0 0
    %146 = vmatpush2.bf16.msra.mxu0 0
    %147 = vmatprep.subr.bf16.mxu0 0
    %148 = vmatpush2.bf16.msra.mxu0 0
    %149 = vmatprep.subr.bf16.mxu0 0
    %150 = vmatpush2.bf16.msra.mxu0 0
    %151 = vmatprep.subr.bf16.mxu0 0
    %152 = vmatpush2.bf16.msra.mxu0 0
    %153 = vmatprep.subr.bf16.mxu0 0
    %154 = vmatpush2.bf16.msra.mxu0 0
    %155 = vmatprep.subr.bf16.mxu0 0
    %156 = vmatpush2.bf16.msra.mxu0 0
    %157 = vmatprep.subr.bf16.mxu0 0
    %158 = vmatpush2.bf16.msra.mxu0 0
    %159 = vmatprep.subr.bf16.mxu0 0
    %160 = vmatpush2.bf16.msra.mxu0 0
    %161 = vmatprep.mubr.bf16.mxu0 0
    %162 = vmatmul.mubr.bf16.gmra.mxu0 %v124
    %v163 = vpop.f32.mrf.mxu0
    %v164 = vadd.f32 %v116, %v163
    %v165 = vpop.f32.mrf.mxu0
    %v166 = vpop.f32.mrf.mxu0
    %v167 = vadd.f32 %v119, %v166
    %v168 = vpop.f32.mrf.mxu0
    %169 = vdwg.mxu0
    %v170 = vld [vmem:[%s4] sm:$0x1]
    %v172 = vlaneseq
    %v173 = vshrl.u32 %v172, 7
    %v174 = vsub.s32 0, %v173
    %v175 = vrot.slane %v170, %v174
    %v177 = vadd.f32 %v164, %v175
    %v178 = vadd.f32 %v167, %v175
    %v179 = vtanh.pop %v177
    %v180 = vtanh.pop %v178
    %v181 = vpack.c.bf16 %v180, %v179
    %v182 = vld [vmem:[#allocation2] sm:$0xf]
    %v183 = vld [vmem:[#allocation2 + $0x4] sm:$0xf]
    %v184 = vld [vmem:[#allocation2 + $0x8] sm:$0xf]
    %v185 = vld [vmem:[#allocation2 + $0xc] sm:$0xf]
    %v186 = vld [vmem:[#allocation2 + $0x10] sm:$0xf]
    %v187 = vld [vmem:[#allocation2 + $0x14] sm:$0xf]
    %v188 = vld [vmem:[#allocation2 + $0x18] sm:$0xf]
    %v189 = vld [vmem:[#allocation2 + $0x1c] sm:$0xf]
    %v190 = vld [vmem:[#allocation2 + $0x20] sm:$0xf]
    %v191 = vld [vmem:[#allocation2 + $0x24] sm:$0xf]
    %v192 = vld [vmem:[#allocation2 + $0x28] sm:$0xf]
    %v193 = vld [vmem:[#allocation2 + $0x2c] sm:$0xf]
    %v194 = vld [vmem:[#allocation2 + $0x30] sm:$0xf]
    %v195 = vld [vmem:[#allocation2 + $0x34] sm:$0xf]
    %v196 = vld [vmem:[#allocation2 + $0x38] sm:$0xf]
    %v197 = vld [vmem:[#allocation2 + $0x3c] sm:$0xf]
    %v198 = vld [vmem:[%s6] sm:$0x1]
    %v200 = vlaneseq
    %v201 = vshrl.u32 %v200, 7
    %v202 = vsub.s32 0, %v201
    %v203 = vrot.slane %v198, %v202
    %v221 = vunpack.c.l.b16 %v182
    %v222 = vunpack.c.l.b16 %v183
    %v223 = vunpack.c.l.b16 %v184
    %v224 = vunpack.c.l.b16 %v185
    %v225 = vunpack.c.l.b16 %v186
    %v226 = vunpack.c.l.b16 %v187
    %v227 = vunpack.c.l.b16 %v188
    %v228 = vunpack.c.l.b16 %v189
    %v229 = vunpack.c.l.b16 %v190
    %v230 = vunpack.c.l.b16 %v191
    %v231 = vunpack.c.l.b16 %v192
    %v232 = vunpack.c.l.b16 %v193
    %v233 = vunpack.c.l.b16 %v194
    %v234 = vunpack.c.l.b16 %v195
    %v235 = vunpack.c.l.b16 %v196
    %v236 = vunpack.c.l.b16 %v197
    %v237 = vpack.c.b16 %v222, %v221
    %v238 = vpack.c.b16 %v224, %v223
    %v239 = vpack.c.b16 %v226, %v225
    %v240 = vpack.c.b16 %v228, %v227
    %v241 = vpack.c.b16 %v230, %v229
    %v242 = vpack.c.b16 %v232, %v231
    %v243 = vpack.c.b16 %v234, %v233
    %v244 = vpack.c.b16 %v236, %v235
    %253 = vmatprep.subr.bf16.mxu0 0
    %254 = vmatpush1.bf16.msra.mxu0 %v244
    %255 = vmatprep.subr.bf16.mxu0 0
    %256 = vmatpush1.bf16.msra.mxu0 %v243
    %257 = vmatprep.subr.bf16.mxu0 0
    %258 = vmatpush1.bf16.msra.mxu0 %v242
    %259 = vmatprep.subr.bf16.mxu0 0
    %260 = vmatpush1.bf16.msra.mxu0 %v241
    %261 = vmatprep.subr.bf16.mxu0 0
    %262 = vmatpush1.bf16.msra.mxu0 %v240
    %263 = vmatprep.subr.bf16.mxu0 0
    %264 = vmatpush1.bf16.msra.mxu0 %v239
    %265 = vmatprep.subr.bf16.mxu0 0
    %266 = vmatpush1.bf16.msra.mxu0 %v238
    %267 = vmatprep.subr.bf16.mxu0 0
    %268 = vmatpush1.bf16.msra.mxu0 %v237
    %269 = vmatprep.subr.bf16.mxu0 0
    %270 = vmatpush2.bf16.msra.mxu0 0
    %271 = vmatprep.subr.bf16.mxu0 0
    %272 = vmatpush2.bf16.msra.mxu0 0
    %273 = vmatprep.subr.bf16.mxu0 0
    %274 = vmatpush2.bf16.msra.mxu0 0
    %275 = vmatprep.subr.bf16.mxu0 0
    %276 = vmatpush2.bf16.msra.mxu0 0
    %277 = vmatprep.subr.bf16.mxu0 0
    %278 = vmatpush2.bf16.msra.mxu0 0
    %279 = vmatprep.subr.bf16.mxu0 0
    %280 = vmatpush2.bf16.msra.mxu0 0
    %281 = vmatprep.subr.bf16.mxu0 0
    %282 = vmatpush2.bf16.msra.mxu0 0
    %283 = vmatprep.subr.bf16.mxu0 0
    %284 = vmatpush2.bf16.msra.mxu0 0
    %285 = vmatprep.mubr.bf16.mxu0 0
    %286 = vmatmul.mubr.bf16.gmra.mxu0 %v181
    %v287 = vpop.f32.mrf.mxu0
    %v288 = vadd.f32 %v203, %v287
    %v289 = vpop.f32.mrf.mxu0
    %v290 = vpop.f32.mrf.mxu0
    %v291 = vadd.f32 %v203, %v290
    %v292 = vpop.f32.mrf.mxu0
    %293 = vdwg.mxu0
    %v294 = vtanh.pop %v288
    %v295 = vtanh.pop %v291
    %v296 = vpack.c.bf16 %v295, %v294
    %v297 = vld [vmem:[#allocation5] sm:$0xf]
    %v298 = vld [vmem:[#allocation5 + $0x4] sm:$0xf]
    %v299 = vld [vmem:[#allocation5 + $0x8] sm:$0xf]
    %v300 = vld [vmem:[#allocation5 + $0xc] sm:$0xf]
    %v301 = vld [vmem:[#allocation5 + $0x10] sm:$0xf]
    %v302 = vld [vmem:[#allocation5 + $0x14] sm:$0xf]
    %v303 = vld [vmem:[#allocation5 + $0x18] sm:$0xf]
    %v304 = vld [vmem:[#allocation5 + $0x1c] sm:$0xf]
    %v305 = vld [vmem:[#allocation5 + $0x20] sm:$0xf]
    %v306 = vld [vmem:[#allocation5 + $0x24] sm:$0xf]
    %v307 = vld [vmem:[#allocation5 + $0x28] sm:$0xf]
    %v308 = vld [vmem:[#allocation5 + $0x2c] sm:$0xf]
    %v309 = vld [vmem:[#allocation5 + $0x30] sm:$0xf]
    %v310 = vld [vmem:[#allocation5 + $0x34] sm:$0xf]
    %v311 = vld [vmem:[#allocation5 + $0x38] sm:$0xf]
    %v312 = vld [vmem:[#allocation5 + $0x3c] sm:$0xf]
    %v313 = vld [vmem:[%s8] sm:$0x1]
    %v315 = vlaneseq
    %v316 = vshrl.u32 %v315, 7
    %v317 = vsub.s32 0, %v316
    %v318 = vrot.slane %v313, %v317
    %v336 = vunpack.c.l.b16 %v297
    %v337 = vunpack.c.l.b16 %v298
    %v338 = vunpack.c.l.b16 %v299
    %v339 = vunpack.c.l.b16 %v300
    %v340 = vunpack.c.l.b16 %v301
    %v341 = vunpack.c.l.b16 %v302
    %v342 = vunpack.c.l.b16 %v303
    %v343 = vunpack.c.l.b16 %v304
    %v344 = vunpack.c.l.b16 %v305
    %v345 = vunpack.c.l.b16 %v306
    %v346 = vunpack.c.l.b16 %v307
    %v347 = vunpack.c.l.b16 %v308
    %v348 = vunpack.c.l.b16 %v309
    %v349 = vunpack.c.l.b16 %v310
    %v350 = vunpack.c.l.b16 %v311
    %v351 = vunpack.c.l.b16 %v312
    %v352 = vpack.c.b16 %v337, %v336
    %v353 = vpack.c.b16 %v339, %v338
    %v354 = vpack.c.b16 %v341, %v340
    %v355 = vpack.c.b16 %v343, %v342
    %v356 = vpack.c.b16 %v345, %v344
    %v357 = vpack.c.b16 %v347, %v346
    %v358 = vpack.c.b16 %v349, %v348
    %v359 = vpack.c.b16 %v351, %v350
    %368 = vmatprep.subr.bf16.mxu0 0
    %369 = vmatpush1.bf16.msra.mxu0 %v359
    %370 = vmatprep.subr.bf16.mxu0 0
    %371 = vmatpush1.bf16.msra.mxu0 %v358
    %372 = vmatprep.subr.bf16.mxu0 0
    %373 = vmatpush1.bf16.msra.mxu0 %v357
    %374 = vmatprep.subr.bf16.mxu0 0
    %375 = vmatpush1.bf16.msra.mxu0 %v356
    %376 = vmatprep.subr.bf16.mxu0 0
    %377 = vmatpush1.bf16.msra.mxu0 %v355
    %378 = vmatprep.subr.bf16.mxu0 0
    %379 = vmatpush1.bf16.msra.mxu0 %v354
    %380 = vmatprep.subr.bf16.mxu0 0
    %381 = vmatpush1.bf16.msra.mxu0 %v353
    %382 = vmatprep.subr.bf16.mxu0 0
    %383 = vmatpush1.bf16.msra.mxu0 %v352
    %384 = vmatprep.subr.bf16.mxu0 0
    %385 = vmatpush2.bf16.msra.mxu0 0
    %386 = vmatprep.subr.bf16.mxu0 0
    %387 = vmatpush2.bf16.msra.mxu0 0
    %388 = vmatprep.subr.bf16.mxu0 0
    %389 = vmatpush2.bf16.msra.mxu0 0
    %390 = vmatprep.subr.bf16.mxu0 0
    %391 = vmatpush2.bf16.msra.mxu0 0
    %392 = vmatprep.subr.bf16.mxu0 0
    %393 = vmatpush2.bf16.msra.mxu0 0
    %394 = vmatprep.subr.bf16.mxu0 0
    %395 = vmatpush2.bf16.msra.mxu0 0
    %396 = vmatprep.subr.bf16.mxu0 0
    %397 = vmatpush2.bf16.msra.mxu0 0
    %398 = vmatprep.subr.bf16.mxu0 0
    %399 = vmatpush2.bf16.msra.mxu0 0
    %400 = vmatprep.mubr.bf16.mxu0 0
    %401 = vmatmul.mubr.bf16.gmra.mxu0 %v296
    %v402 = vpop.f32.mrf.mxu0
    %v403 = vadd.f32 %v318, %v402
    %v404 = vpop.f32.mrf.mxu0
    %v405 = vpop.f32.mrf.mxu0
    %v406 = vadd.f32 %v318, %v405
    %v407 = vpop.f32.mrf.mxu0
    %408 = vdwg.mxu0
    %409 = vst [vmem:[#allocation7] sm:$0xff] %v403
    %410 = vst [vmem:[#allocation7 + $0x8] sm:$0xff] %v406
    // Predicated region
    $region46: #{tpu_custom_call.1} parent=1 // pred_check
      _
    $region47: #{tpu_custom_call.1} parent=1 // pred_check_branch
      %412 = sbr.rel (0) target = $region49
    $region48: #{tpu_custom_call.1} parent=1 // pred_region
      %s414 = ssub.s32 256, 256
      %415 = vsyncadd [#allocation4], %s414
      %s416 = sshll.u32 [#allocation7], 4
      %s417 = int_to_ptr.vmem [resolvable:$true] %s416
      %422 = dma.vmem_to_hbm [thread:$0]  %s417, 256, %s9, [#allocation4], 128, 128, 8
    $region49: #{tpu_custom_call.1} parent=1 // pred_fallthru
      _
    // Predicated region
    $region50: #{tpu_custom_call.1} parent=1 // pred_check
      _
    $region51: #{tpu_custom_call.1} parent=1 // pred_check_branch
      %424 = sbr.rel (0) target = $region53
    $region52: #{tpu_custom_call.1} parent=1 // pred_region
      %425 = dma.done [#allocation4], 256
    $region53: #{tpu_custom_call.1} parent=1 // pred_fallthru
      _
    %426 = vsyncpa [#allocation3], 1
    %427 = vsyncpa [#allocation6], 1
    %428 = vsyncpa [#allocation4], 1

</llo_original>
